<compile_context>
chip_gen: v7x
topology: tpu7x:2x2x1
jax: 0.10.0
libtpu: 0.0.40
codegen_flags: <defaults>
</compile_context>

<pallas_src>
import functools

import numpy as np

import jax
import jax.numpy as jnp
from jax.experimental import pallas as pl
from jax.experimental.pallas import tpu as pltpu


# Number of independent (sender, receiver, loss) draws produced per launch.
# (8, 512) int32 = 16 KiB: trivially fits VMEM on v5e/v6e/v7x, lane-dense.
DEFAULT_BATCH_LANES = 512


def _make_sampler_kernel(n_send: int, n_recv: int, n_loss: int, lanes: int):
    """Kernel mapping raw random bits -> uniform indices (sizes are static)."""

    def kernel(bits_ref, idx_ref):
        bits = bits_ref[...]                               # int32 (8, lanes)
        # Low 24 bits -> exact float32 uniform in [0, 1). Avoids integer divide
        # (no HW int div on TPU VPU) and modulo bias.
        b24 = bits & jnp.int32(0x00FFFFFF)
        u = b24.astype(jnp.float32) * jnp.float32(1.0 / float(1 << 24))
        # Per-sublane modulus: sublane 0 -> n_send, 1 -> n_recv, 2 -> n_loss,
        # rest -> 1.  All compile-time constants -> folds to a constant vreg.
        sub = jax.lax.broadcasted_iota(jnp.int32, (8, lanes), 0)
        n = jnp.where(
            sub == 0, jnp.int32(n_send),
            jnp.where(sub == 1, jnp.int32(n_recv),
                      jnp.where(sub == 2, jnp.int32(n_loss), jnp.int32(1))))
        idx = jnp.floor(u * n.astype(jnp.float32)).astype(jnp.int32)
        idx_ref[...] = jnp.minimum(idx, n - 1)             # safety clamp

    return kernel


@functools.partial(jax.jit, static_argnums=(1, 2, 3, 4))
def _draw_batch(key, n_send: int, n_recv: int, n_loss: int, lanes: int):
    """One launch: LANES independent (sender, receiver, loss) index draws."""
    raw = jax.random.bits(key, (8, lanes), dtype=jnp.uint32)
    bits = jax.lax.bitcast_convert_type(raw, jnp.int32)
    return pl.pallas_call(
        _make_sampler_kernel(n_send, n_recv, n_loss, lanes),
        out_shape=jax.ShapeDtypeStruct((8, lanes), jnp.int32),
        in_specs=[pl.BlockSpec(memory_space=pltpu.MemorySpace.VMEM)],
        out_specs=pl.BlockSpec(memory_space=pltpu.MemorySpace.VMEM),
    )(bits)


# ----------------------------------------------------------------------------
# Deterministic "agents" and "losses" (UniformAgentSampler.forward never calls
# them; they only need to be identifiable objects).
# ----------------------------------------------------------------------------
class LinearAgent:
    def __init__(self, name: str, in_dim: int, out_dim: int, key):
        self.name = name
        self.weight = jax.random.normal(key, (in_dim, out_dim), dtype=jnp.float32)

    def __call__(self, x):
        return x @ self.weight

    def __repr__(self):
        return f"LinearAgent({self.name}, w={tuple(self.weight.shape)})"


def loss_mse(pred, target):
    return jnp.mean((pred - target) ** 2)


def loss_l1(pred, target):
    return jnp.mean(jnp.abs(pred - target))


class UniformAgentSampler:
    """JAX/Pallas port of egg.core.population.UniformAgentSampler.

    Semantics match the PyTorch module: each forward() returns one uniformly
    sampled (sender, receiver, loss).  Draws are generated on-device in batches
    of `batch_lanes` and cached on host; the Python list selection is host glue
    (no tensor work exists in the reference forward()).
    """

    def __init__(self, senders, receivers, losses, seed: int = 0,
                 batch_lanes: int = DEFAULT_BATCH_LANES):
        self.senders = list(senders)
        self.receivers = list(receivers)
        self.losses = list(losses)
        self._base_key = jax.random.PRNGKey(seed)
        self._batch_counter = 0
        self._lanes = int(batch_lanes)
        self._cache = None
        self._cursor = self._lanes  # force refill on first call

    def _refill(self):
        key = jax.random.fold_in(self._base_key, self._batch_counter)
        self._batch_counter += 1
        slab = _draw_batch(key, len(self.senders), len(self.receivers),
                           len(self.losses), self._lanes)
        # Single device->host transfer for the whole batch of draws.
        self._cache = np.asarray(jax.block_until_ready(slab))
        self._cursor = 0

    def forward(self):
        if self._cursor >= self._lanes:
            self._refill()
        c = self._cursor
        self._cursor += 1
        s_idx = int(self._cache[0, c])
        r_idx = int(self._cache[1, c])
        l_idx = int(self._cache[2, c])
        return self.senders[s_idx], self.receivers[r_idx], self.losses[l_idx]

    __call__ = forward


if __name__ == "__main__":
    key = jax.random.PRNGKey(0)
    ks = jax.random.split(key, 8)

    hidden, vocab = 32, 8
    senders = [LinearAgent(f"sender_{i}", hidden, vocab, ks[i]) for i in range(3)]
    receivers = [LinearAgent(f"receiver_{i}", vocab, hidden, ks[3 + i]) for i in range(2)]
    losses = [loss_mse, loss_l1]

    # Run the Pallas kernel once directly and block on the result.
    slab = _draw_batch(jax.random.PRNGKey(0), len(senders), len(receivers),
                       len(losses), DEFAULT_BATCH_LANES)
    slab = jax.block_until_ready(slab)
    slab_np = np.asarray(slab)

    # Every draw in the batch must be a valid index.
    assert slab_np.shape == (8, DEFAULT_BATCH_LANES)
    assert slab_np[0].min() >= 0 and slab_np[0].max() < len(senders)
    assert slab_np[1].min() >= 0 and slab_np[1].max() < len(receivers)
    assert slab_np[2].min() >= 0 and slab_np[2].max() < len(losses)
    assert np.all(slab_np[3:] == 0)

    # Full forward-pass semantics: uniformly sampled (sender, receiver, loss).
    sampler = UniformAgentSampler(senders, receivers, losses, seed=0)
    for _ in range(16):
        sender, receiver, loss_fn = sampler()
        assert sender in senders and receiver in receivers and loss_fn in losses

    print("KERNEL_OK")
</pallas_src>

<mosaic_0001>
module attributes {stable_mosaic.version = 11 : i64} {
  func.func @kernel(%arg0: memref<8x512xi32, #tpu.memory_space<vmem>>, %arg1: memref<8x512xi32, #tpu.memory_space<vmem>>) attributes {dimension_semantics = [], scalar_prefetch = 0 : i64, scratch_operands = 0 : i64, tpu.core_type = #tpu.core_type<tc>} {
    %c0 = arith.constant 0 : index
    %c0_0 = arith.constant 0 : index
    %0 = vector.load %arg0[%c0, %c0_0] : memref<8x512xi32, #tpu.memory_space<vmem>>, vector<8x512xi32>
    %c16777215_i32 = arith.constant 16777215 : i32
    %1 = vector.broadcast %c16777215_i32 : i32 to vector<8x512xi32>
    %2 = arith.andi %0, %1 : vector<8x512xi32>
    %3 = arith.sitofp %2 : vector<8x512xi32> to vector<8x512xf32>
    %cst = arith.constant 5.96046448E-8 : f32
    %4 = vector.broadcast %cst : f32 to vector<8x512xf32>
    %5 = arith.mulf %3, %4 : vector<8x512xf32>
    %6 = tpu.iota {dimensions = array<i32: 0>} : vector<8x512xi32>
    %c0_i32 = arith.constant 0 : i32
    %7 = vector.broadcast %c0_i32 : i32 to vector<8x512xi32>
    %8 = arith.cmpi eq, %6, %7 : vector<8x512xi32>
    %c1_i32 = arith.constant 1 : i32
    %9 = vector.broadcast %c1_i32 : i32 to vector<8x512xi32>
    %10 = arith.cmpi eq, %6, %9 : vector<8x512xi32>
    %c2_i32 = arith.constant 2 : i32
    %11 = vector.broadcast %c2_i32 : i32 to vector<8x512xi32>
    %12 = arith.cmpi eq, %6, %11 : vector<8x512xi32>
    %c2_i32_1 = arith.constant 2 : i32
    %c1_i32_2 = arith.constant 1 : i32
    %13 = vector.broadcast %c2_i32_1 : i32 to vector<8x512xi32>
    %14 = vector.broadcast %c1_i32_2 : i32 to vector<8x512xi32>
    %15 = arith.select %12, %13, %14 : vector<8x512xi1>, vector<8x512xi32>
    %c2_i32_3 = arith.constant 2 : i32
    %16 = vector.broadcast %c2_i32_3 : i32 to vector<8x512xi32>
    %17 = arith.select %10, %16, %15 : vector<8x512xi1>, vector<8x512xi32>
    %c3_i32 = arith.constant 3 : i32
    %18 = vector.broadcast %c3_i32 : i32 to vector<8x512xi32>
    %19 = arith.select %8, %18, %17 : vector<8x512xi1>, vector<8x512xi32>
    %20 = arith.sitofp %19 : vector<8x512xi32> to vector<8x512xf32>
    %21 = arith.mulf %5, %20 : vector<8x512xf32>
    %22 = math.floor %21 : vector<8x512xf32>
    %23 = arith.fptosi %22 : vector<8x512xf32> to vector<8x512xi32>
    %c1_i32_4 = arith.constant 1 : i32
    %24 = vector.broadcast %c1_i32_4 : i32 to vector<8x512xi32>
    %25 = arith.subi %19, %24 : vector<8x512xi32>
    %26 = arith.minsi %23, %25 : vector<8x512xi32>
    %c0_5 = arith.constant 0 : index
    %c0_6 = arith.constant 0 : index
    %27 = vector.load %arg1[%c0_5, %c0_6] : memref<8x512xi32, #tpu.memory_space<vmem>>, vector<8x512xi32>
    tpu.vector_store %arg1[%c0_5, %c0_6], %26 {strides = array<i32>} : memref<8x512xi32, #tpu.memory_space<vmem>>, vector<8x512xi32>,
    return
  }
}

</mosaic_0001>

<llo_original>
// kernel: _draw_batch.1
$region0: #{_draw_batch.1}
  #allocation0 [shape = 'u32[]', space=smem, size = 0x4, offset = 0x4, fixed_abs, tag = 'smem constant byte address 0x4 - core index']
  #allocation1 [shape = 'u32[144,128]{1,0:T(1,128)}', space=vmem, size = 0x12000, scoped, tag = 'internal scratch']
  %s0 = inlined_call_operand.vmem [shape: s32[8,512], index: 0, kind: input, shape index: {}]
  %s1 = inlined_call_operand.hbm [shape: s32[8,512], index: 1, kind: output, shape index: {}]
  %s2 = sld [smem:[#allocation0]]
  $region14: #{_draw_batch.1} parent=0
    _
  %s4 = ssub.s32 1, %s2
  %s5 = scalar_select 0, %s4, %s2
  $region1: #{_draw_batch.1} parent=0
    #allocation2 [shape = 'u8[16384]{0}', space=vmem, size = 0x4000, scoped, tag = 'output window, operand 0, single buffered']
    #allocation3 [shape = 's32[1]{0}', space=sflag, size = 0x4, scoped, tag = 'scoped memory for _draw_batch.1']
    %6 = vsyncpa [#allocation3], 0
    // Predicated region
    $region2: #{_draw_batch.1} parent=1 // pred_check
      _
    $region3: #{_draw_batch.1} parent=1 // pred_check_branch
      %8 = sbr.rel (0) target = $region5
    $region4: #{_draw_batch.1} parent=1 // pred_region
      _
    $region5: #{_draw_batch.1} parent=1 // pred_fallthru
      _
    %v9 = vld [vmem:[%s0] sm:$0xff]
    %v10 = vld [vmem:[%s0 + $0x8] sm:$0xff]
    %v11 = vld [vmem:[%s0 + $0x10] sm:$0xff]
    %v12 = vld [vmem:[%s0 + $0x18] sm:$0xff]
    %v13 = vand.u32 %v9, 16777215
    %v14 = vand.u32 %v10, 16777215
    %v15 = vand.u32 %v11, 16777215
    %v16 = vand.u32 %v12, 16777215
    %v17 = vcvt.s32.f32 %v13
    %v18 = vcvt.s32.f32 %v14
    %v19 = vcvt.s32.f32 %v15
    %v20 = vcvt.s32.f32 %v16
    %v21 = vmul.f32 %v17, 5.9604645e-08
    %v22 = vmul.f32 %v18, 5.9604645e-08
    %v23 = vmul.f32 %v19, 5.9604645e-08
    %v24 = vmul.f32 %v20, 5.9604645e-08
    %v25 = vlaneseq
    %v26 = vshrl.u32 %v25, 7
    %vm27 = vcmp.eq.s32.totalorder %v26, 0
    %vm28 = vcmp.eq.s32.totalorder %v26, 1
    %vm29 = vcmp.eq.s32.totalorder %v26, 2
    %v30 = vsel %vm29, 2, 1
    %v31 = vsel %vm28, 2, %v30
    %v32 = vsel %vm27, 3, %v31
    %v33 = vcvt.s32.f32 %v32
    %v34 = vmul.f32 %v21, %v33
    %v35 = vmul.f32 %v22, %v33
    %v36 = vmul.f32 %v23, %v33
    %v37 = vmul.f32 %v24, %v33
    %v38 = vfloor.f32 %v34
    %v39 = vfloor.f32 %v35
    %v40 = vfloor.f32 %v36
    %v41 = vfloor.f32 %v37
    %v42 = vcvt.f32.s32.to.zero.pseudo %v38
    %v43 = vcvt.f32.s32.to.zero.pseudo %v39
    %v44 = vcvt.f32.s32.to.zero.pseudo %v40
    %v45 = vcvt.f32.s32.to.zero.pseudo %v41
    %v46 = vsub.s32 %v32, 1
    %vm47 = vcmp.lt.s32.totalorder %v42, %v46
    %v48 = vsel %vm47, %v42, %v46
    %vm49 = vcmp.lt.s32.totalorder %v43, %v46
    %v50 = vsel %vm49, %v43, %v46
    %vm51 = vcmp.lt.s32.totalorder %v44, %v46
    %v52 = vsel %vm51, %v44, %v46
    %vm53 = vcmp.lt.s32.totalorder %v45, %v46
    %v54 = vsel %vm53, %v45, %v46
    %55 = vst [vmem:[#allocation2] sm:$0xff] %v48
    %56 = vst [vmem:[#allocation2 + $0x8] sm:$0xff] %v50
    %57 = vst [vmem:[#allocation2 + $0x10] sm:$0xff] %v52
    %58 = vst [vmem:[#allocation2 + $0x18] sm:$0xff] %v54
    // Predicated region
    $region6: #{_draw_batch.1} parent=1 // pred_check
      _
    $region7: #{_draw_batch.1} parent=1 // pred_check_branch
      %60 = sbr.rel (0) target = $region9
    $region8: #{_draw_batch.1} parent=1 // pred_region
      %s62 = ssub.s32 512, 512
      %63 = vsyncadd [#allocation3], %s62
      %s65 = sshll.u32 [#allocation2], 4
      %s66 = int_to_ptr.vmem [resolvable:$true] %s65
      %68 = dma.vmem_to_hbm [thread:$0]  %s66, 512, %s1, [#allocation3]
    $region9: #{_draw_batch.1} parent=1 // pred_fallthru
      _
    // Predicated region
    $region10: #{_draw_batch.1} parent=1 // pred_check
      _
    $region11: #{_draw_batch.1} parent=1 // pred_check_branch
      %70 = sbr.rel (0) target = $region13
    $region12: #{_draw_batch.1} parent=1 // pred_region
      %71 = dma.done [#allocation3], 512
    $region13: #{_draw_batch.1} parent=1 // pred_fallthru
      _
    %72 = vsyncpa [#allocation3], 1

</llo_original>
